<compile_context>
chip_gen: v6e
topology: v6e:2x2x1
jax: 0.10.0
libtpu: 0.0.40
codegen_flags: <defaults>
</compile_context>

<pallas_src>
import jax
import jax.numpy as jnp
from jax.experimental import pallas as pl
from jax.experimental.pallas import tpu as pltpu

# Matches the buggy-but-exact PyTorch behaviour: LeakyReLU(negative_slope=True) -> 1.0
NEGATIVE_SLOPE = 1.0

SUBLANE = 8   # TPU vreg sublane count (second-to-last dim alignment)


def _round_up(x, m):
    return ((x + m - 1) // m) * m


def _leaky_relu(x, slope):
    return jnp.where(x >= 0, x, slope * x)


# ----------------------------------------------------------------------------
# Kernels
# ----------------------------------------------------------------------------
def _ae_fused_kernel(x_ref, w_ref, b_ref, o_ref):
    """Identity-activation path: the whole autoencoder is x @ W_eff + b_eff."""
    h = jnp.dot(x_ref[...], w_ref[...], preferred_element_type=jnp.float32)
    o_ref[...] = (h + b_ref[...]).astype(o_ref.dtype)


def _ae_mlp_kernel(x_ref,
                   w1_ref, b1_ref,
                   w2_ref, b2_ref,
                   w3_ref, b3_ref,
                   w4_ref, b4_ref,
                   o_ref):
    """General path (only used when NEGATIVE_SLOPE != 1.0): 4 matmuls + LeakyReLU."""
    h = x_ref[...].astype(jnp.float32)
    h = _leaky_relu(jnp.dot(h, w1_ref[...], preferred_element_type=jnp.float32)
                    + b1_ref[...], NEGATIVE_SLOPE)
    h = _leaky_relu(jnp.dot(h, w2_ref[...], preferred_element_type=jnp.float32)
                    + b2_ref[...], NEGATIVE_SLOPE)
    h = _leaky_relu(jnp.dot(h, w3_ref[...], preferred_element_type=jnp.float32)
                    + b3_ref[...], NEGATIVE_SLOPE)
    h = _leaky_relu(jnp.dot(h, w4_ref[...], preferred_element_type=jnp.float32)
                    + b4_ref[...], NEGATIVE_SLOPE)
    o_ref[...] = h.astype(o_ref.dtype)


# ----------------------------------------------------------------------------
# Wrapper
# ----------------------------------------------------------------------------
def _choose_tile(B, batch_tile):
    """Sublane-aligned batch tile, >= 2 grid steps when the batch allows it."""
    half = max(SUBLANE, _round_up(-(-B // 2), SUBLANE))   # ceil(B/2), 8-aligned
    tile = min(batch_tile, half)
    return _round_up(max(tile, SUBLANE), SUBLANE)


def autoencoder_forward(x, params, *, batch_tile=4096):
    """x: (B, in_dim) float32.  params: w1..w4 of shape (in,out), b1..b4 of (1,out)."""
    B, in_dim = x.shape

    w1, b1 = params["w1"], params["b1"]
    w2, b2 = params["w2"], params["b2"]
    w3, b3 = params["w3"], params["b3"]
    w4, b4 = params["w4"], params["b4"]
    hid_dim = w1.shape[1]
    lat_dim = w2.shape[1]

    tile = _choose_tile(B, batch_tile)
    B_p = _round_up(B, tile)
    xp = jnp.pad(x, ((0, B_p - B), (0, 0))) if B_p != B else x
    grid = (B_p // tile,)

    row_spec = pl.BlockSpec((tile, in_dim), lambda i: (i, 0))
    out_spec = pl.BlockSpec((tile, in_dim), lambda i: (i, 0))

    def full_spec(shape):
        # Whole-array block, same block every grid step (grid-invariant weights/biases).
        return pl.BlockSpec(shape, lambda i: (0,) * len(shape))

    itemsize = 4  # f32
    if NEGATIVE_SLOPE == 1.0:
        # Identity activations: fold the four linears into a single affine map.
        # Exact (in real arithmetic) given the module's fixed slope of 1.0.
        w_eff = w1 @ w2 @ w3 @ w4                        # (in_dim, in_dim)
        b_eff = ((b1 @ w2 + b2) @ w3 + b3) @ w4 + b4     # (1, in_dim)

        flops = 2 * B_p * in_dim * in_dim
        bytes_accessed = itemsize * (2 * B_p * in_dim        # x in, out
                                     + in_dim * in_dim       # W_eff (once)
                                     + in_dim)               # b_eff (once)

        out = pl.pallas_call(
            _ae_fused_kernel,
            out_shape=jax.ShapeDtypeStruct((B_p, in_dim), x.dtype),
            grid_spec=pltpu.PrefetchScalarGridSpec(
                num_scalar_prefetch=0,
                grid=grid,
                in_specs=[row_spec,
                          full_spec((in_dim, in_dim)),
                          full_spec((1, in_dim))],
                out_specs=out_spec,
            ),
            compiler_params=pltpu.CompilerParams(
                dimension_semantics=("parallel",),   # batch tiles shard across v7x's 2 TCs
            ),
            cost_estimate=pl.CostEstimate(
                flops=flops, transcendentals=0, bytes_accessed=bytes_accessed),
        )(xp, w_eff, b_eff)
    else:
        flops = 2 * B_p * (in_dim * hid_dim + hid_dim * lat_dim
                           + lat_dim * hid_dim + hid_dim * in_dim)
        bytes_accessed = itemsize * (
            2 * B_p * in_dim                                     # x in, out
            + 2 * in_dim * hid_dim + 2 * hid_dim * lat_dim       # weights (once each)
            + 2 * hid_dim + lat_dim + in_dim)                    # biases (once each)

        out = pl.pallas_call(
            _ae_mlp_kernel,
            out_shape=jax.ShapeDtypeStruct((B_p, in_dim), x.dtype),
            grid_spec=pltpu.PrefetchScalarGridSpec(
                num_scalar_prefetch=0,
                grid=grid,
                in_specs=[row_spec,
                          full_spec((in_dim, hid_dim)), full_spec((1, hid_dim)),
                          full_spec((hid_dim, lat_dim)), full_spec((1, lat_dim)),
                          full_spec((lat_dim, hid_dim)), full_spec((1, hid_dim)),
                          full_spec((hid_dim, in_dim)), full_spec((1, in_dim))],
                out_specs=out_spec,
            ),
            compiler_params=pltpu.CompilerParams(
                dimension_semantics=("parallel",),
            ),
            cost_estimate=pl.CostEstimate(
                flops=flops, transcendentals=0, bytes_accessed=bytes_accessed),
        )(xp, w1, b1, w2, b2, w3, b3, w4, b4)

    return out[:B] if B_p != B else out


# ----------------------------------------------------------------------------
# Params / reference / demo
# ----------------------------------------------------------------------------
def init_params(key, in_dim, hid_dim, lat_dim, dtype=jnp.float32):
    """Deterministic synthetic params. Weights stored (in_features, out_features)."""
    ks = jax.random.split(key, 8)

    def linear(kw, kb, fan_in, fan_out):
        # Uniform(-1/sqrt(fan_in), 1/sqrt(fan_in)) like PyTorch's default Linear init.
        bound = 1.0 / jnp.sqrt(jnp.asarray(fan_in, dtype))
        w = jax.random.uniform(kw, (fan_in, fan_out), dtype, -bound, bound)
        b = jax.random.uniform(kb, (1, fan_out), dtype, -bound, bound)
        return w, b

    w1, b1 = linear(ks[0], ks[1], in_dim, hid_dim)
    w2, b2 = linear(ks[2], ks[3], hid_dim, lat_dim)
    w3, b3 = linear(ks[4], ks[5], lat_dim, hid_dim)
    w4, b4 = linear(ks[6], ks[7], hid_dim, in_dim)
    return dict(w1=w1, b1=b1, w2=w2, b2=b2, w3=w3, b3=b3, w4=w4, b4=b4)


def reference_forward(x, params):
    """Pure-JAX reference mirroring the PyTorch module (layer by layer)."""
    h = x
    h = _leaky_relu(h @ params["w1"] + params["b1"], NEGATIVE_SLOPE)
    h = _leaky_relu(h @ params["w2"] + params["b2"], NEGATIVE_SLOPE)
    h = _leaky_relu(h @ params["w3"] + params["b3"], NEGATIVE_SLOPE)
    h = _leaky_relu(h @ params["w4"] + params["b4"], NEGATIVE_SLOPE)
    return h


if __name__ == "__main__":
    key = jax.random.PRNGKey(0)
    k_params, k_x = jax.random.split(key)

    # Small shapes consistent with the module's MLP forward.
    batch, in_dim, hid_dim, lat_dim = 256, 16, 32, 8

    params = init_params(k_params, in_dim, hid_dim, lat_dim)
    x = jax.random.normal(k_x, (batch, in_dim), jnp.float32)

    out = autoencoder_forward(x, params, batch_tile=4096)
    out = jax.block_until_ready(out)

    ref = reference_forward(x, params)
    assert out.shape == (batch, in_dim)
    assert jnp.allclose(out, ref, atol=2e-5, rtol=2e-5), "mismatch vs JAX reference"

    print("KERNEL_OK")
</pallas_src>

<mosaic_0001>
module attributes {stable_mosaic.version = 11 : i64} {
  func.func @_ae_fused_kernel(%arg0: i32, %arg1: memref<128x16xf32, #tpu.memory_space<vmem>>, %arg2: memref<16x16xf32, #tpu.memory_space<vmem>>, %arg3: memref<1x16xf32, #tpu.memory_space<vmem>>, %arg4: memref<128x16xf32, #tpu.memory_space<vmem>>) attributes {dimension_semantics = [#tpu.dimension_semantics<parallel>], iteration_bounds = array<i64: 2>, scalar_prefetch = 0 : i64, scratch_operands = 0 : i64, tpu.core_type = #tpu.core_type<tc>, window_params = [{transform_indices = @transform_0, window_bounds = array<i64: 128, 16>}, {pipeline_mode = #tpu.pipeline_mode<synchronous>, transform_indices = @transform_1, window_bounds = array<i64: 16, 16>}, {pipeline_mode = #tpu.pipeline_mode<synchronous>, transform_indices = @transform_2, window_bounds = array<i64: 1, 16>}, {transform_indices = @transform_3, window_bounds = array<i64: 128, 16>}]} {
    %c0 = arith.constant 0 : index
    %c0_0 = arith.constant 0 : index
    %0 = vector.load %arg1[%c0, %c0_0] : memref<128x16xf32, #tpu.memory_space<vmem>>, vector<128x16xf32>
    %c0_1 = arith.constant 0 : index
    %c0_2 = arith.constant 0 : index
    %1 = vector.load %arg2[%c0_1, %c0_2] : memref<16x16xf32, #tpu.memory_space<vmem>>, vector<16x16xf32>
    %cst = arith.constant dense<0.000000e+00> : vector<128x16xf32>
    %2 = tpu.matmul %0, %1, %cst {dimension_numbers = #tpu.dot_dimension_numbers<[1], [0], [0], [1], [0, 0, 1, 1], [], []>} : vector<128x16xf32>, vector<16x16xf32>, vector<128x16xf32> -> vector<128x16xf32>
    %c0_3 = arith.constant 0 : index
    %c0_4 = arith.constant 0 : index
    %3 = vector.load %arg3[%c0_3, %c0_4] : memref<1x16xf32, #tpu.memory_space<vmem>>, vector<1x16xf32>
    %4 = vector.broadcast %3 : vector<1x16xf32> to vector<128x16xf32>
    %5 = arith.addf %2, %4 : vector<128x16xf32>
    %c0_5 = arith.constant 0 : index
    %c0_6 = arith.constant 0 : index
    %6 = vector.load %arg4[%c0_5, %c0_6] : memref<128x16xf32, #tpu.memory_space<vmem>>, vector<128x16xf32>
    tpu.vector_store %arg4[%c0_5, %c0_6], %5 {strides = array<i32>} : memref<128x16xf32, #tpu.memory_space<vmem>>, vector<128x16xf32>,
    return
  }
  func.func @transform_0(%arg0: i32) -> (i32, i32) {
    %c0_i32 = arith.constant 0 : i32
    %c0_i32_0 = arith.constant 0 : i32
    return %arg0, %c0_i32 : i32, i32
  }
  func.func @transform_1(%arg0: i32) -> (i32, i32) {
    %c0_i32 = arith.constant 0 : i32
    %c0_i32_0 = arith.constant 0 : i32
    %c0_i32_1 = arith.constant 0 : i32
    return %c0_i32, %c0_i32_0 : i32, i32
  }
  func.func @transform_2(%arg0: i32) -> (i32, i32) {
    %c0_i32 = arith.constant 0 : i32
    %c0_i32_0 = arith.constant 0 : i32
    %c0_i32_1 = arith.constant 0 : i32
    return %c0_i32, %c0_i32_0 : i32, i32
  }
  func.func @transform_3(%arg0: i32) -> (i32, i32) {
    %c0_i32 = arith.constant 0 : i32
    %c0_i32_0 = arith.constant 0 : i32
    return %arg0, %c0_i32 : i32, i32
  }
}

</mosaic_0001>

<llo_original>
// kernel: tpu_custom_call.1
$region0: #{tpu_custom_call.1}
  #allocation0 [shape = 'u32[]', space=smem, size = 0x4, offset = 0x4, fixed_abs, tag = 'smem constant byte address 0x4 - core index']
  #allocation1 [shape = 'u32[144,128]{1,0:T(1,128)}', space=vmem, size = 0x12000, scoped, tag = 'internal scratch']
  %s0 = inlined_call_operand.vmem [shape: f32[256,16], index: 0, kind: input, shape index: {}]
  %s1 = inlined_call_operand.vmem [shape: f32[16,16], index: 1, kind: input, shape index: {}]
  %s2 = inlined_call_operand.vmem [shape: f32[1,16], index: 2, kind: input, shape index: {}]
  %s3 = inlined_call_operand.vmem [shape: f32[256,16], index: 3, kind: output, shape index: {}]
  %s4 = sld [smem:[#allocation0]]
  $region45: #{tpu_custom_call.1} parent=0
    _
  %s6 = ssub.s32 1, %s4
  %s7 = scalar_select 0, %s6, %s4
  loop: start=0, step=1, limit=4
  $region2: #{tpu_custom_call.1} parent=0 // loop_pre_header
    _
  $region3: #{tpu_custom_call.1} parent=0 // loop_header
    %s9 = sphi 0, %s13
    %p10 = scmp.ge.s32.totalorder %s9, 4
    %s19 = sphi 0, %s21
    %s22 = sphi 0, %s19
    %s23 = sphi 0, %s22
    %s39 = sphi 0, %s23
    %s43 = sphi 0, %s43
    %s45 = sphi 0, %s43
    %s46 = sphi 0, %s45
    %s60 = sphi 0, %s46
    %s64 = sphi 0, %s64
    %s66 = sphi 0, %s64
    %s67 = sphi 0, %s66
    %s81 = sphi 0, %s67
    %s87 = sphi 0, %s89
    %s90 = sphi 0, %s87
    %s91 = sphi 0, %s90
    %s107 = sphi 0, %s91
  $region4: #{tpu_custom_call.1} parent=0 // loop_header_branch
    %12 = sbr.rel (%p10) target = $region8
  $region5: #{tpu_custom_call.1} parent=0 // loop_body
    %s14 = ssub.s32 %s9, 1
    %s15 = ssub.s32 %s9, 2
    %s16 = sadd.s32 %s9, 1
    %s17 = ssub.s32 %s9, %s16
    %p18 = scmp.eq.s32.totalorder %s17, 0
    %s20 = sadd.s32 %s19, 1
    %s21 = scalar_select %p18, %s19, %s20
    %p24 = pneg %p18
    %p25 = scmp.eq.s32.totalorder %s9, 1
    %p26 = por %p24, %p25
    %p27 = scmp.ne.s32.totalorder %s19, %s22
    %p28 = scmp.eq.s32.totalorder %s9, 0
    %p29 = por %p27, %p28
    %p30 = scmp.ne.s32.totalorder %s19, %s22
    %p31 = scmp.eq.s32.totalorder %s14, 1
    %p32 = por %p30, %p31
    %p33 = scmp.ne.s32.totalorder %s22, %s23
    %p34 = scmp.eq.s32.totalorder %s14, 0
    %p35 = por %p33, %p34
    %p36 = scmp.ne.s32.totalorder %s22, %s23
    %p37 = scmp.eq.s32.totalorder %s15, 1
    %p38 = por %p36, %p37
    %p40 = scmp.ne.s32.totalorder %s23, %s39
    %p41 = scmp.eq.s32.totalorder %s15, 0
    %p42 = por %p40, %p41
    %s44 = sadd.s32 %s43, 1
    %p47 = scmp.eq.s32.totalorder %s9, 1
    %p48 = scmp.ne.s32.totalorder %s43, %s45
    %p49 = scmp.eq.s32.totalorder %s9, 0
    %p50 = por %p48, %p49
    %p51 = scmp.ne.s32.totalorder %s43, %s45
    %p52 = scmp.eq.s32.totalorder %s14, 1
    %p53 = por %p51, %p52
    %p54 = scmp.ne.s32.totalorder %s45, %s46
    %p55 = scmp.eq.s32.totalorder %s14, 0
    %p56 = por %p54, %p55
    %p57 = scmp.ne.s32.totalorder %s45, %s46
    %p58 = scmp.eq.s32.totalorder %s15, 1
    %p59 = por %p57, %p58
    %p61 = scmp.ne.s32.totalorder %s46, %s60
    %p62 = scmp.eq.s32.totalorder %s15, 0
    %p63 = por %p61, %p62
    %s65 = sadd.s32 %s64, 1
    %p68 = scmp.eq.s32.totalorder %s9, 1
    %p69 = scmp.ne.s32.totalorder %s64, %s66
    %p70 = scmp.eq.s32.totalorder %s9, 0
    %p71 = por %p69, %p70
    %p72 = scmp.ne.s32.totalorder %s64, %s66
    %p73 = scmp.eq.s32.totalorder %s14, 1
    %p74 = por %p72, %p73
    %p75 = scmp.ne.s32.totalorder %s66, %s67
    %p76 = scmp.eq.s32.totalorder %s14, 0
    %p77 = por %p75, %p76
    %p78 = scmp.ne.s32.totalorder %s66, %s67
    %p79 = scmp.eq.s32.totalorder %s15, 1
    %p80 = por %p78, %p79
    %p82 = scmp.ne.s32.totalorder %s67, %s81
    %p83 = scmp.eq.s32.totalorder %s15, 0
    %p84 = por %p82, %p83
    %s85 = ssub.s32 %s9, %s16
    %p86 = scmp.eq.s32.totalorder %s85, 0
    %s88 = sadd.s32 %s87, 1
    %s89 = scalar_select %p86, %s87, %s88
    %p92 = pneg %p86
    %p93 = scmp.eq.s32.totalorder %s9, 1
    %p94 = por %p92, %p93
    %p95 = scmp.ne.s32.totalorder %s87, %s90
    %p96 = scmp.eq.s32.totalorder %s9, 0
    %p97 = por %p95, %p96
    %p98 = scmp.ne.s32.totalorder %s87, %s90
    %p99 = scmp.eq.s32.totalorder %s14, 1
    %p100 = por %p98, %p99
    %p101 = scmp.ne.s32.totalorder %s90, %s91
    %p102 = scmp.eq.s32.totalorder %s14, 0
    %p103 = por %p101, %p102
    %p104 = scmp.ne.s32.totalorder %s90, %s91
    %p105 = scmp.eq.s32.totalorder %s15, 1
    %p106 = por %p104, %p105
    %p108 = scmp.ne.s32.totalorder %s91, %s107
    %p109 = scmp.eq.s32.totalorder %s15, 0
    %p110 = por %p108, %p109
    %p111 = scmp.le.s32.totalorder 1, %s9
    %p112 = scmp.lt.s32.totalorder %s9, 3
    %p113 = pnand %p111, %p112
    %p114 = pneg %p113
    // Predicated region
    $region9: #{tpu_custom_call.1} parent=5 // pred_check
      _
    $region10: #{tpu_custom_call.1} parent=5 // pred_check_branch
      %116 = sbr.rel (%p113) target = $region12
    $region11: #{tpu_custom_call.1} parent=5 // pred_region
      %s117 = ssub.s32 %s9, 1
      // Predicated region
      $region13: #{tpu_custom_call.1} parent=11 // pred_check
        %p118 = pneg %p56
      $region14: #{tpu_custom_call.1} parent=11 // pred_check_branch
        %120 = sbr.rel (%p118) target = $region16
      $region15: #{tpu_custom_call.1} parent=11 // pred_region
        _
      $region16: #{tpu_custom_call.1} parent=11 // pred_fallthru
        _
      // Predicated region
      $region17: #{tpu_custom_call.1} parent=11 // pred_check
        %p121 = pneg %p77
      $region18: #{tpu_custom_call.1} parent=11 // pred_check_branch
        %123 = sbr.rel (%p121) target = $region20
      $region19: #{tpu_custom_call.1} parent=11 // pred_region
        _
      $region20: #{tpu_custom_call.1} parent=11 // pred_fallthru
        _
    $region12: #{tpu_custom_call.1} parent=5 // pred_fallthru
      _
    %p124 = scmp.lt.s32.totalorder %s9, 2
    // Predicated region
    $region21: #{tpu_custom_call.1} parent=5 // pred_check
      %p125 = pneg %p124
    $region22: #{tpu_custom_call.1} parent=5 // pred_check_branch
      %127 = sbr.rel (%p125) target = $region24
    $region23: #{tpu_custom_call.1} parent=5 // pred_region
      // Predicated region
      $region25: #{tpu_custom_call.1} parent=23 // pred_check
        %p128 = pneg %p29
      $region26: #{tpu_custom_call.1} parent=23 // pred_check_branch
        %130 = sbr.rel (%p128) target = $region28
      $region27: #{tpu_custom_call.1} parent=23 // pred_region
        %s131 = smul.u32 16, %s9
        %p132 = scmp.lt.s32.totalorder %s131, 31
        %s133 = scalar_select %p132, %s131, 31
        %s134 = smul.addr %s133, 8
        %s135 = scalar_lea.vmem %s0, %s134
        %s136 = smul.u32 16, %s9
      $region28: #{tpu_custom_call.1} parent=23 // pred_fallthru
        _
    $region24: #{tpu_custom_call.1} parent=5 // pred_fallthru
      _
    %p137 = scmp.le.s32.totalorder 1, %s9
    %p138 = scmp.lt.s32.totalorder %s9, 3
    %p139 = pnand %p137, %p138
    %p140 = pneg %p139
    // Predicated region
    $region29: #{tpu_custom_call.1} parent=5 // pred_check
      _
    $region30: #{tpu_custom_call.1} parent=5 // pred_check_branch
      %142 = sbr.rel (%p139) target = $region32
    $region31: #{tpu_custom_call.1} parent=5 // pred_region
      %s143 = ssub.s32 %s9, 1
      %s144 = smul.u32 16, %s14
      %p145 = scmp.lt.s32.totalorder %s144, 31
      %s146 = scalar_select %p145, %s144, 31
      %s147 = smul.addr %s146, 8
      %s148 = scalar_lea.vmem %s0, %s147
      %p149 = pneg %p35
      %p150 = pneg %p32
      %p151 = pneg %p56
      %p152 = pneg %p53
      %p153 = pneg %p77
      %p154 = pneg %p74
      %p155 = pneg %p103
      %p156 = pneg %p100
      %s157 = smul.u32 16, %s14
      %p158 = scmp.lt.s32.totalorder %s157, 31
      %s159 = scalar_select %p158, %s157, 31
      %s160 = smul.addr %s159, 8
      %s161 = scalar_lea.vmem %s3, %s160
      %s162 = smul.u32 16, %s14
      %p163 = scmp.lt.s32.totalorder %s162, 31
      %s164 = scalar_select %p163, %s162, 31
      %s165 = smul.addr %s164, 8
      %s166 = scalar_lea.vmem %s0, %s165
      %s167 = smul.u32 16, %s14
      %s168 = smul.u32 16, %s14
      %p169 = scmp.lt.s32.totalorder %s168, 31
      %s170 = scalar_select %p169, %s168, 31
      %s171 = smul.addr %s170, 8
      %s172 = scalar_lea.vmem %s3, %s171
      %s173 = smul.u32 16, %s14
      %v174 = vld [vmem:[%s166] sm:$0xff]
      %v175 = vld [vmem:[%s166 + $0x8] sm:$0xff]
      %v176 = vld [vmem:[%s166 + $0x10] sm:$0xff]
      %v177 = vld [vmem:[%s166 + $0x18] sm:$0xff]
      %v178 = vld [vmem:[%s166 + $0x20] sm:$0xff]
      %v179 = vld [vmem:[%s166 + $0x28] sm:$0xff]
      %v180 = vld [vmem:[%s166 + $0x30] sm:$0xff]
      %v181 = vld [vmem:[%s166 + $0x38] sm:$0xff]
      %v182 = vld [vmem:[%s166 + $0x40] sm:$0xff]
      %v183 = vld [vmem:[%s166 + $0x48] sm:$0xff]
      %v184 = vld [vmem:[%s166 + $0x50] sm:$0xff]
      %v185 = vld [vmem:[%s166 + $0x58] sm:$0xff]
      %v186 = vld [vmem:[%s166 + $0x60] sm:$0xff]
      %v187 = vld [vmem:[%s166 + $0x68] sm:$0xff]
      %v188 = vld [vmem:[%s166 + $0x70] sm:$0xff]
      %v189 = vld [vmem:[%s166 + $0x78] sm:$0xff]
      %v190 = vld [vmem:[%s1] sm:$0xff]
      %v191 = vld [vmem:[%s1 + $0x8] sm:$0xff]
      %v192 = vld [vmem:[%s2] sm:$0x1]
      %v194 = vlaneseq
      %v195 = vshrl.u32 %v194, 7
      %v196 = vsub.s32 0, %v195
      %v197 = vrot.slane %v192, %v196
      %vm199 = vcmask 130048
      %v201 = vsel %vm199, %v174, 0
      %v204 = vsel %vm199, %v175, 0
      %v207 = vsel %vm199, %v176, 0
      %v210 = vsel %vm199, %v177, 0
      %v213 = vsel %vm199, %v178, 0
      %v216 = vsel %vm199, %v179, 0
      %v219 = vsel %vm199, %v180, 0
      %v222 = vsel %vm199, %v181, 0
      %v225 = vsel %vm199, %v182, 0
      %v228 = vsel %vm199, %v183, 0
      %v231 = vsel %vm199, %v184, 0
      %v234 = vsel %vm199, %v185, 0
      %v237 = vsel %vm199, %v186, 0
      %v240 = vsel %vm199, %v187, 0
      %v243 = vsel %vm199, %v188, 0
      %v246 = vsel %vm199, %v189, 0
      %248 = vmatprep.subr.mxu0 0.0
      %249 = vmatpush1.msra.mxu0 0.0
      %250 = vmatprep.subr.mxu0 0.0
      %251 = vmatpush1.msra.mxu0 0.0
      %252 = vmatprep.subr.mxu0 0.0
      %253 = vmatpush1.msra.mxu0 0.0
      %254 = vmatprep.subr.mxu0 0.0
      %255 = vmatpush1.msra.mxu0 0.0
      %256 = vmatprep.subr.mxu0 0.0
      %257 = vmatpush1.msra.mxu0 0.0
      %258 = vmatprep.subr.mxu0 0.0
      %259 = vmatpush1.msra.mxu0 0.0
      %260 = vmatprep.subr.mxu0 0.0
      %261 = vmatpush1.msra.mxu0 0.0
      %262 = vmatprep.subr.mxu0 0.0
      %263 = vmatpush1.msra.mxu0 0.0
      %264 = vmatprep.subr.mxu0 0.0
      %265 = vmatpush1.msra.mxu0 0.0
      %266 = vmatprep.subr.mxu0 0.0
      %267 = vmatpush1.msra.mxu0 0.0
      %268 = vmatprep.subr.mxu0 0.0
      %269 = vmatpush1.msra.mxu0 0.0
      %270 = vmatprep.subr.mxu0 0.0
      %271 = vmatpush1.msra.mxu0 0.0
      %272 = vmatprep.subr.mxu0 0.0
      %273 = vmatpush1.msra.mxu0 0.0
      %274 = vmatprep.subr.mxu0 0.0
      %275 = vmatpush1.msra.mxu0 0.0
      %276 = vmatprep.subr.mxu0 0.0
      %277 = vmatpush1.msra.mxu0 %v191
      %278 = vmatprep.subr.mxu0 0.0
      %279 = vmatpush1.msra.mxu0 %v190
      %280 = vmatprep.subr.mxu0 0.0
      %281 = vmatpush2.msra.mxu0 0.0
      %282 = vmatprep.subr.mxu0 0.0
      %283 = vmatpush2.msra.mxu0 0.0
      %284 = vmatprep.subr.mxu0 0.0
      %285 = vmatpush2.msra.mxu0 0.0
      %286 = vmatprep.subr.mxu0 0.0
      %287 = vmatpush2.msra.mxu0 0.0
      %288 = vmatprep.subr.mxu0 0.0
      %289 = vmatpush2.msra.mxu0 0.0
      %290 = vmatprep.subr.mxu0 0.0
      %291 = vmatpush2.msra.mxu0 0.0
      %292 = vmatprep.subr.mxu0 0.0
      %293 = vmatpush2.msra.mxu0 0.0
      %294 = vmatprep.subr.mxu0 0.0
      %295 = vmatpush2.msra.mxu0 0.0
      %296 = vmatprep.subr.mxu0 0.0
      %297 = vmatpush2.msra.mxu0 0.0
      %298 = vmatprep.subr.mxu0 0.0
      %299 = vmatpush2.msra.mxu0 0.0
      %300 = vmatprep.subr.mxu0 0.0
      %301 = vmatpush2.msra.mxu0 0.0
      %302 = vmatprep.subr.mxu0 0.0
      %303 = vmatpush2.msra.mxu0 0.0
      %304 = vmatprep.subr.mxu0 0.0
      %305 = vmatpush2.msra.mxu0 0.0
      %306 = vmatprep.subr.mxu0 0.0
      %307 = vmatpush2.msra.mxu0 0.0
      %308 = vmatprep.subr.mxu0 0.0
      %309 = vmatpush2.msra.mxu0 0.0
      %310 = vmatprep.subr.mxu0 0.0
      %311 = vmatpush2.msra.mxu0 0.0
      %312 = vmatprep.mubr.f32.mxu0 0.0
      %313 = vmatmul.mubr.f32.gmra.mxu0 %v201
      %v314 = vpop.f32.mrf.mxu0
      %v315 = vadd.f32 %v197, %v314
      %v316 = vpop.f32.mrf.mxu0
      %317 = vmatprep.mubr.f32.mxu0 0.0
      %318 = vmatmul.mubr.f32.gmra.mxu0 %v204
      %v319 = vpop.f32.mrf.mxu0
      %v320 = vadd.f32 %v197, %v319
      %v321 = vpop.f32.mrf.mxu0
      %322 = vmatprep.mubr.f32.mxu0 0.0
      %323 = vmatmul.mubr.f32.gmra.mxu0 %v207
      %v324 = vpop.f32.mrf.mxu0
      %v325 = vadd.f32 %v197, %v324
      %v326 = vpop.f32.mrf.mxu0
      %327 = vmatprep.mubr.f32.mxu0 0.0
      %328 = vmatmul.mubr.f32.gmra.mxu0 %v210
      %v329 = vpop.f32.mrf.mxu0
      %v330 = vadd.f32 %v197, %v329
      %v331 = vpop.f32.mrf.mxu0
      %332 = vmatprep.mubr.f32.mxu0 0.0
      %333 = vmatmul.mubr.f32.gmra.mxu0 %v213
      %v334 = vpop.f32.mrf.mxu0
      %v335 = vadd.f32 %v197, %v334
      %v336 = vpop.f32.mrf.mxu0
      %337 = vmatprep.mubr.f32.mxu0 0.0
      %338 = vmatmul.mubr.f32.gmra.mxu0 %v216
      %v339 = vpop.f32.mrf.mxu0
      %v340 = vadd.f32 %v197, %v339
      %v341 = vpop.f32.mrf.mxu0
      %342 = vmatprep.mubr.f32.mxu0 0.0
      %343 = vmatmul.mubr.f32.gmra.mxu0 %v219
      %v344 = vpop.f32.mrf.mxu0
      %v345 = vadd.f32 %v197, %v344
      %v346 = vpop.f32.mrf.mxu0
      %347 = vmatprep.mubr.f32.mxu0 0.0
      %348 = vmatmul.mubr.f32.gmra.mxu0 %v222
      %v349 = vpop.f32.mrf.mxu0
      %v350 = vadd.f32 %v197, %v349
      %v351 = vpop.f32.mrf.mxu0
      %352 = vmatprep.mubr.f32.mxu0 0.0
      %353 = vmatmul.mubr.f32.gmra.mxu0 %v225
      %v354 = vpop.f32.mrf.mxu0
      %v355 = vadd.f32 %v197, %v354
      %v356 = vpop.f32.mrf.mxu0
      %357 = vmatprep.mubr.f32.mxu0 0.0
      %358 = vmatmul.mubr.f32.gmra.mxu0 %v228
      %v359 = vpop.f32.mrf.mxu0
      %v360 = vadd.f32 %v197, %v359
      %v361 = vpop.f32.mrf.mxu0
      %362 = vmatprep.mubr.f32.mxu0 0.0
      %363 = vmatmul.mubr.f32.gmra.mxu0 %v231
      %v364 = vpop.f32.mrf.mxu0
      %v365 = vadd.f32 %v197, %v364
      %v366 = vpop.f32.mrf.mxu0
      %367 = vmatprep.mubr.f32.mxu0 0.0
      %368 = vmatmul.mubr.f32.gmra.mxu0 %v234
      %v369 = vpop.f32.mrf.mxu0
      %v370 = vadd.f32 %v197, %v369
      %v371 = vpop.f32.mrf.mxu0
      %372 = vmatprep.mubr.f32.mxu0 0.0
      %373 = vmatmul.mubr.f32.gmra.mxu0 %v237
      %v374 = vpop.f32.mrf.mxu0
      %v375 = vadd.f32 %v197, %v374
      %v376 = vpop.f32.mrf.mxu0
      %377 = vmatprep.mubr.f32.mxu0 0.0
      %378 = vmatmul.mubr.f32.gmra.mxu0 %v240
      %v379 = vpop.f32.mrf.mxu0
      %v380 = vadd.f32 %v197, %v379
      %v381 = vpop.f32.mrf.mxu0
      %382 = vmatprep.mubr.f32.mxu0 0.0
      %383 = vmatmul.mubr.f32.gmra.mxu0 %v243
      %v384 = vpop.f32.mrf.mxu0
      %v385 = vadd.f32 %v197, %v384
      %v386 = vpop.f32.mrf.mxu0
      %387 = vmatprep.mubr.f32.mxu0 0.0
      %388 = vmatmul.mubr.f32.gmra.mxu0 %v246
      %v389 = vpop.f32.mrf.mxu0
      %v390 = vadd.f32 %v197, %v389
      %v391 = vpop.f32.mrf.mxu0
      %392 = vdwg.mxu0
      %393 = vst.msk [vmem:[%s172] sm:$0xff] %vm199, %v315
      %394 = vst.msk [vmem:[%s172 + $0x8] sm:$0xff] %vm199, %v320
      %395 = vst.msk [vmem:[%s172 + $0x10] sm:$0xff] %vm199, %v325
      %396 = vst.msk [vmem:[%s172 + $0x18] sm:$0xff] %vm199, %v330
      %397 = vst.msk [vmem:[%s172 + $0x20] sm:$0xff] %vm199, %v335
      %398 = vst.msk [vmem:[%s172 + $0x28] sm:$0xff] %vm199, %v340
      %399 = vst.msk [vmem:[%s172 + $0x30] sm:$0xff] %vm199, %v345
      %400 = vst.msk [vmem:[%s172 + $0x38] sm:$0xff] %vm199, %v350
      %401 = vst.msk [vmem:[%s172 + $0x40] sm:$0xff] %vm199, %v355
      %402 = vst.msk [vmem:[%s172 + $0x48] sm:$0xff] %vm199, %v360
      %403 = vst.msk [vmem:[%s172 + $0x50] sm:$0xff] %vm199, %v365
      %404 = vst.msk [vmem:[%s172 + $0x58] sm:$0xff] %vm199, %v370
      %405 = vst.msk [vmem:[%s172 + $0x60] sm:$0xff] %vm199, %v375
      %406 = vst.msk [vmem:[%s172 + $0x68] sm:$0xff] %vm199, %v380
      %407 = vst.msk [vmem:[%s172 + $0x70] sm:$0xff] %vm199, %v385
      %408 = vst.msk [vmem:[%s172 + $0x78] sm:$0xff] %vm199, %v390
      %s409 = smul.u32 16, %s14
      %p410 = scmp.lt.s32.totalorder %s409, 31
      %s411 = scalar_select %p410, %s409, 31
      %s412 = smul.addr %s411, 8
      %s413 = scalar_lea.vmem %s3, %s412
      // Predicated region
      $region33: #{tpu_custom_call.1} parent=31 // pred_check
        %p414 = pneg %p100
      $region34: #{tpu_custom_call.1} parent=31 // pred_check_branch
        %416 = sbr.rel (%p414) target = $region36
      $region35: #{tpu_custom_call.1} parent=31 // pred_region
        %s417 = smul.u32 16, %s14
      $region36: #{tpu_custom_call.1} parent=31 // pred_fallthru
        _
    $region32: #{tpu_custom_call.1} parent=5 // pred_fallthru
      _
    %p418 = scmp.le.s32.totalorder 2, %s9
    // Predicated region
    $region37: #{tpu_custom_call.1} parent=5 // pred_check
      %p419 = pneg %p418
    $region38: #{tpu_custom_call.1} parent=5 // pred_check_branch
      %421 = sbr.rel (%p419) target = $region40
    $region39: #{tpu_custom_call.1} parent=5 // pred_region
      %s422 = ssub.s32 %s9, 2
      // Predicated region
      $region41: #{tpu_custom_call.1} parent=39 // pred_check
        %p423 = pneg %p106
      $region42: #{tpu_custom_call.1} parent=39 // pred_check_branch
        %425 = sbr.rel (%p423) target = $region44
      $region43: #{tpu_custom_call.1} parent=39 // pred_region
        %s426 = smul.u32 16, %s15
        %p427 = scmp.lt.s32.totalorder %s426, 31
        %s428 = scalar_select %p427, %s426, 31
        %s429 = smul.addr %s428, 8
        %s430 = scalar_lea.vmem %s3, %s429
      $region44: #{tpu_custom_call.1} parent=39 // pred_fallthru
        _
    $region40: #{tpu_custom_call.1} parent=5 // pred_fallthru
      _
  $region6: #{tpu_custom_call.1} parent=0 // loop_footer
    %s13 = sadd.s32 1, %s9
  $region7: #{tpu_custom_call.1} parent=0 // loop_footer_branch
    %8 = sbr.rel target = $region3
  $region8: #{tpu_custom_call.1} parent=0 // loop_exit
    _

</llo_original>
